<compile_context>
chip_gen: v7x
topology: tpu7x:2x2x1
jax: 0.10.0
libtpu: 0.0.40
codegen_flags: <defaults>
</compile_context>

<pallas_src>
import functools

import jax
import jax.numpy as jnp
from jax.experimental import pallas as pl
from jax.experimental.pallas import tpu as pltpu

H1 = 128  # fc1 output width (already lane-dense)
H2 = 64   # fc2 output width (padded to 128 inside the wrapper)


def _round_up(x, m):
    return ((x + m - 1) // m) * m


def mlp_kernel(x_ref, w1_ref, b1_ref, w2_ref, b2_ref, w3_ref, b3_ref, o_ref):
    # fc1 + bias + ReLU (dropout = identity in eval mode). f32 accumulation.
    h1 = jnp.dot(x_ref[...], w1_ref[...], preferred_element_type=jnp.float32)
    h1 = jnp.maximum(h1 + b1_ref[...], 0.0)

    # fc2 + bias + ReLU. Cast activation to the weight dtype for the MXU,
    # accumulate in f32, keep VPU math (bias/ReLU) in f32.
    h2 = jnp.dot(h1.astype(w2_ref.dtype), w2_ref[...],
                 preferred_element_type=jnp.float32)
    h2 = jnp.maximum(h2 + b2_ref[...], 0.0)

    # fc3 + bias (lane-dense padded output).
    o = jnp.dot(h2.astype(w3_ref.dtype), w3_ref[...],
                preferred_element_type=jnp.float32)
    o_ref[...] = (o + b3_ref[...]).astype(o_ref.dtype)


@functools.partial(jax.jit, static_argnames=("tm", "use_bf16"))
def chatbot_forward(x, params, *, tm=256, use_bf16=True):
    """x: (B, input_size) float32. params: dict of (in,out) weights, (1,out) biases."""
    B, in_size = x.shape
    out_size = params["w3"].shape[1]

    # Lane-dense padded widths.
    h2p = _round_up(H2, 128)
    outp = _round_up(out_size, 128)

    # Batch tile: multiple of 16 (safe for bf16 sublane packing); pad B up to a
    # whole number of tiles so every grid step is a full tile.
    TM = min(tm, _round_up(B, 16))
    Bp = _round_up(B, TM)

    mxu_dtype = jnp.bfloat16 if use_bf16 else jnp.float32

    xp = x if Bp == B else jnp.pad(x, ((0, Bp - B), (0, 0)))
    xp = xp.astype(mxu_dtype)

    w1 = params["w1"].astype(mxu_dtype)
    b1 = params["b1"]
    w2 = jnp.pad(params["w2"], ((0, 0), (0, h2p - H2))).astype(mxu_dtype)
    b2 = jnp.pad(params["b2"], ((0, 0), (0, h2p - H2)))
    w3 = jnp.pad(params["w3"],
                 ((0, h2p - H2), (0, outp - out_size))).astype(mxu_dtype)
    b3 = jnp.pad(params["b3"], ((0, 0), (0, outp - out_size)))

    n_tiles = Bp // TM

    # Advisory cost hint for XLA's scheduler.
    flops = 2 * Bp * (in_size * H1 + H1 * h2p + h2p * outp)
    bytes_accessed = (
        xp.size * xp.dtype.itemsize
        + sum(a.size * a.dtype.itemsize for a in (w1, b1, w2, b2, w3, b3))
        + Bp * outp * 4
    )
    cost = pl.CostEstimate(flops=int(flops), transcendentals=0,
                           bytes_accessed=int(bytes_accessed))

    grid_spec = pltpu.PrefetchScalarGridSpec(
        num_scalar_prefetch=0,
        grid=(n_tiles,),
        in_specs=[
            pl.BlockSpec((TM, in_size), lambda i: (i, 0)),   # x tile (pipelined)
            pl.BlockSpec((in_size, H1), lambda i: (0, 0)),   # w1 (resident)
            pl.BlockSpec((1, H1), lambda i: (0, 0)),         # b1
            pl.BlockSpec((H1, h2p), lambda i: (0, 0)),       # w2
            pl.BlockSpec((1, h2p), lambda i: (0, 0)),        # b2
            pl.BlockSpec((h2p, outp), lambda i: (0, 0)),     # w3
            pl.BlockSpec((1, outp), lambda i: (0, 0)),       # b3
        ],
        out_specs=pl.BlockSpec((TM, outp), lambda i: (i, 0)),
    )

    out_padded = pl.pallas_call(
        mlp_kernel,
        out_shape=jax.ShapeDtypeStruct((Bp, outp), jnp.float32),
        grid_spec=grid_spec,
        compiler_params=pltpu.CompilerParams(
            dimension_semantics=("parallel",),  # shards batch across TCs on v7x
        ),
        cost_estimate=cost,
    )(xp, w1, b1, w2, b2, w3, b3)

    return out_padded[:B, :out_size]


def init_params(key, input_size, output_size):
    """nn.Linear-style init (uniform +/- 1/sqrt(fan_in)).
    Weights are stored pre-transposed as (in_features, out_features)."""
    def linear(k, fan_in, fan_out):
        kw, kb = jax.random.split(k)
        bound = 1.0 / jnp.sqrt(fan_in)
        w = jax.random.uniform(kw, (fan_in, fan_out), jnp.float32, -bound, bound)
        b = jax.random.uniform(kb, (1, fan_out), jnp.float32, -bound, bound)
        return w, b

    k1, k2, k3 = jax.random.split(key, 3)
    w1, b1 = linear(k1, input_size, H1)
    w2, b2 = linear(k2, H1, H2)
    w3, b3 = linear(k3, H2, output_size)
    return dict(w1=w1, b1=b1, w2=w2, b2=b2, w3=w3, b3=b3)


def reference_forward(x, p):
    h1 = jnp.maximum(x @ p["w1"] + p["b1"], 0.0)
    h2 = jnp.maximum(h1 @ p["w2"] + p["b2"], 0.0)
    return h2 @ p["w3"] + p["b3"]


if __name__ == "__main__":
    key = jax.random.PRNGKey(0)
    kx, kp = jax.random.split(key)

    batch, input_size, output_size = 8, 64, 32
    x = jax.random.normal(kx, (batch, input_size), jnp.float32)
    params = init_params(kp, input_size, output_size)

    ref = reference_forward(x, params)

    # Exact-precision path (f32 MXU operands): tight tolerance vs f32 reference.
    out_f32 = jax.block_until_ready(chatbot_forward(x, params, use_bf16=False))
    assert out_f32.shape == (batch, output_size)
    assert jnp.allclose(out_f32, ref, atol=1e-5, rtol=1e-5)

    # Fast path (bf16 MXU operands, f32 accumulation): loose tolerance.
    out_bf16 = jax.block_until_ready(chatbot_forward(x, params, use_bf16=True))
    assert out_bf16.shape == (batch, output_size)
    assert jnp.allclose(out_bf16, ref, atol=1e-1, rtol=1e-1)

    print("KERNEL_OK")
</pallas_src>

<mosaic_0001>
module attributes {stable_mosaic.version = 11 : i64} {
  func.func @mlp_kernel(%arg0: i32, %arg1: memref<16x64xf32, #tpu.memory_space<vmem>>, %arg2: memref<64x128xf32, #tpu.memory_space<vmem>>, %arg3: memref<1x128xf32, #tpu.memory_space<vmem>>, %arg4: memref<128x128xf32, #tpu.memory_space<vmem>>, %arg5: memref<1x128xf32, #tpu.memory_space<vmem>>, %arg6: memref<128x128xf32, #tpu.memory_space<vmem>>, %arg7: memref<1x128xf32, #tpu.memory_space<vmem>>, %arg8: memref<16x128xf32, #tpu.memory_space<vmem>>) attributes {dimension_semantics = [#tpu.dimension_semantics<parallel>], iteration_bounds = array<i64: 1>, scalar_prefetch = 0 : i64, scratch_operands = 0 : i64, tpu.core_type = #tpu.core_type<tc>, window_params = [{transform_indices = @transform_0, window_bounds = array<i64: 16, 64>}, {pipeline_mode = #tpu.pipeline_mode<synchronous>, transform_indices = @transform_1, window_bounds = array<i64: 64, 128>}, {pipeline_mode = #tpu.pipeline_mode<synchronous>, transform_indices = @transform_2, window_bounds = array<i64: 1, 128>}, {pipeline_mode = #tpu.pipeline_mode<synchronous>, transform_indices = @transform_3, window_bounds = array<i64: 128, 128>}, {pipeline_mode = #tpu.pipeline_mode<synchronous>, transform_indices = @transform_4, window_bounds = array<i64: 1, 128>}, {pipeline_mode = #tpu.pipeline_mode<synchronous>, transform_indices = @transform_5, window_bounds = array<i64: 128, 128>}, {pipeline_mode = #tpu.pipeline_mode<synchronous>, transform_indices = @transform_6, window_bounds = array<i64: 1, 128>}, {transform_indices = @transform_7, window_bounds = array<i64: 16, 128>}]} {
    %c0 = arith.constant 0 : index
    %c0_0 = arith.constant 0 : index
    %0 = vector.load %arg1[%c0, %c0_0] : memref<16x64xf32, #tpu.memory_space<vmem>>, vector<16x64xf32>
    %c0_1 = arith.constant 0 : index
    %c0_2 = arith.constant 0 : index
    %1 = vector.load %arg2[%c0_1, %c0_2] : memref<64x128xf32, #tpu.memory_space<vmem>>, vector<64x128xf32>
    %cst = arith.constant dense<0.000000e+00> : vector<16x128xf32>
    %2 = tpu.matmul %0, %1, %cst {dimension_numbers = #tpu.dot_dimension_numbers<[1], [0], [0], [1], [0, 0, 1, 1], [], []>} : vector<16x64xf32>, vector<64x128xf32>, vector<16x128xf32> -> vector<16x128xf32>
    %c0_3 = arith.constant 0 : index
    %c0_4 = arith.constant 0 : index
    %3 = vector.load %arg3[%c0_3, %c0_4] : memref<1x128xf32, #tpu.memory_space<vmem>>, vector<1x128xf32>
    %4 = vector.broadcast %3 : vector<1x128xf32> to vector<16x128xf32>
    %5 = arith.addf %2, %4 : vector<16x128xf32>
    %cst_5 = arith.constant 0.000000e+00 : f32
    %6 = vector.broadcast %cst_5 : f32 to vector<16x128xf32>
    %7 = arith.maximumf %5, %6 : vector<16x128xf32>
    %c0_6 = arith.constant 0 : index
    %c0_7 = arith.constant 0 : index
    %8 = vector.load %arg4[%c0_6, %c0_7] : memref<128x128xf32, #tpu.memory_space<vmem>>, vector<128x128xf32>
    %cst_8 = arith.constant dense<0.000000e+00> : vector<16x128xf32>
    %9 = tpu.matmul %7, %8, %cst_8 {dimension_numbers = #tpu.dot_dimension_numbers<[1], [0], [0], [1], [0, 0, 1, 1], [], []>} : vector<16x128xf32>, vector<128x128xf32>, vector<16x128xf32> -> vector<16x128xf32>
    %c0_9 = arith.constant 0 : index
    %c0_10 = arith.constant 0 : index
    %10 = vector.load %arg5[%c0_9, %c0_10] : memref<1x128xf32, #tpu.memory_space<vmem>>, vector<1x128xf32>
    %11 = vector.broadcast %10 : vector<1x128xf32> to vector<16x128xf32>
    %12 = arith.addf %9, %11 : vector<16x128xf32>
    %cst_11 = arith.constant 0.000000e+00 : f32
    %13 = vector.broadcast %cst_11 : f32 to vector<16x128xf32>
    %14 = arith.maximumf %12, %13 : vector<16x128xf32>
    %c0_12 = arith.constant 0 : index
    %c0_13 = arith.constant 0 : index
    %15 = vector.load %arg6[%c0_12, %c0_13] : memref<128x128xf32, #tpu.memory_space<vmem>>, vector<128x128xf32>
    %cst_14 = arith.constant dense<0.000000e+00> : vector<16x128xf32>
    %16 = tpu.matmul %14, %15, %cst_14 {dimension_numbers = #tpu.dot_dimension_numbers<[1], [0], [0], [1], [0, 0, 1, 1], [], []>} : vector<16x128xf32>, vector<128x128xf32>, vector<16x128xf32> -> vector<16x128xf32>
    %c0_15 = arith.constant 0 : index
    %c0_16 = arith.constant 0 : index
    %17 = vector.load %arg7[%c0_15, %c0_16] : memref<1x128xf32, #tpu.memory_space<vmem>>, vector<1x128xf32>
    %18 = vector.broadcast %17 : vector<1x128xf32> to vector<16x128xf32>
    %19 = arith.addf %16, %18 : vector<16x128xf32>
    %c0_17 = arith.constant 0 : index
    %c0_18 = arith.constant 0 : index
    %20 = vector.load %arg8[%c0_17, %c0_18] : memref<16x128xf32, #tpu.memory_space<vmem>>, vector<16x128xf32>
    tpu.vector_store %arg8[%c0_17, %c0_18], %19 {strides = array<i32>} : memref<16x128xf32, #tpu.memory_space<vmem>>, vector<16x128xf32>,
    return
  }
  func.func @transform_0(%arg0: i32) -> (i32, i32) {
    %c0_i32 = arith.constant 0 : i32
    %c0_i32_0 = arith.constant 0 : i32
    return %arg0, %c0_i32 : i32, i32
  }
  func.func @transform_1(%arg0: i32) -> (i32, i32) {
    %c0_i32 = arith.constant 0 : i32
    %c0_i32_0 = arith.constant 0 : i32
    %c0_i32_1 = arith.constant 0 : i32
    return %c0_i32, %c0_i32_0 : i32, i32
  }
  func.func @transform_2(%arg0: i32) -> (i32, i32) {
    %c0_i32 = arith.constant 0 : i32
    %c0_i32_0 = arith.constant 0 : i32
    %c0_i32_1 = arith.constant 0 : i32
    return %c0_i32, %c0_i32_0 : i32, i32
  }
  func.func @transform_3(%arg0: i32) -> (i32, i32) {
    %c0_i32 = arith.constant 0 : i32
    %c0_i32_0 = arith.constant 0 : i32
    %c0_i32_1 = arith.constant 0 : i32
    return %c0_i32, %c0_i32_0 : i32, i32
  }
  func.func @transform_4(%arg0: i32) -> (i32, i32) {
    %c0_i32 = arith.constant 0 : i32
    %c0_i32_0 = arith.constant 0 : i32
    %c0_i32_1 = arith.constant 0 : i32
    return %c0_i32, %c0_i32_0 : i32, i32
  }
  func.func @transform_5(%arg0: i32) -> (i32, i32) {
    %c0_i32 = arith.constant 0 : i32
    %c0_i32_0 = arith.constant 0 : i32
    %c0_i32_1 = arith.constant 0 : i32
    return %c0_i32, %c0_i32_0 : i32, i32
  }
  func.func @transform_6(%arg0: i32) -> (i32, i32) {
    %c0_i32 = arith.constant 0 : i32
    %c0_i32_0 = arith.constant 0 : i32
    %c0_i32_1 = arith.constant 0 : i32
    return %c0_i32, %c0_i32_0 : i32, i32
  }
  func.func @transform_7(%arg0: i32) -> (i32, i32) {
    %c0_i32 = arith.constant 0 : i32
    %c0_i32_0 = arith.constant 0 : i32
    return %arg0, %c0_i32 : i32, i32
  }
}

</mosaic_0001>

<llo_original>
// kernel: chatbot_forward.1
$region0: #{chatbot_forward.1}
  #allocation0 [shape = 'u32[]', space=smem, size = 0x4, offset = 0x4, fixed_abs, tag = 'smem constant byte address 0x4 - core index']
  #allocation1 [shape = 'u32[144,128]{1,0:T(1,128)}', space=vmem, size = 0x12000, scoped, tag = 'internal scratch']
  %s0 = inlined_call_operand.vmem [shape: f32[16,64], index: 0, kind: input, shape index: {}]
  %s1 = inlined_call_operand.vmem [shape: f32[64,128], index: 1, kind: input, shape index: {}]
  %s2 = inlined_call_operand.vmem [shape: f32[1,128], index: 2, kind: input, shape index: {}]
  %s3 = inlined_call_operand.vmem [shape: f32[128,128], index: 3, kind: input, shape index: {}]
  %s4 = inlined_call_operand.vmem [shape: f32[1,128], index: 4, kind: input, shape index: {}]
  %s5 = inlined_call_operand.vmem [shape: f32[128,128], index: 5, kind: input, shape index: {}]
  %s6 = inlined_call_operand.vmem [shape: f32[1,128], index: 6, kind: input, shape index: {}]
  %s7 = inlined_call_operand.vmem [shape: f32[16,128], index: 7, kind: output, shape index: {}]
  %s8 = sld [smem:[#allocation0]]
  $region38: #{chatbot_forward.1} parent=0
    _
  %s10 = ssub.s32 1, %s8
  %s11 = scalar_select 0, %s10, %s8
  // Predicated region
  $region2: #{chatbot_forward.1} parent=0 // pred_check
    _
  $region3: #{chatbot_forward.1} parent=0 // pred_check_branch
    %13 = sbr.rel (0) target = $region5
  $region4: #{chatbot_forward.1} parent=0 // pred_region
    _
  $region5: #{chatbot_forward.1} parent=0 // pred_fallthru
    _
  // Predicated region
  $region6: #{chatbot_forward.1} parent=0 // pred_check
    _
  $region7: #{chatbot_forward.1} parent=0 // pred_check_branch
    %15 = sbr.rel (0) target = $region9
  $region8: #{chatbot_forward.1} parent=0 // pred_region
    _
  $region9: #{chatbot_forward.1} parent=0 // pred_fallthru
    _
  // Predicated region
  $region10: #{chatbot_forward.1} parent=0 // pred_check
    _
  $region11: #{chatbot_forward.1} parent=0 // pred_check_branch
    %17 = sbr.rel (0) target = $region13
  $region12: #{chatbot_forward.1} parent=0 // pred_region
    _
  $region13: #{chatbot_forward.1} parent=0 // pred_fallthru
    _
  // Predicated region
  $region14: #{chatbot_forward.1} parent=0 // pred_check
    _
  $region15: #{chatbot_forward.1} parent=0 // pred_check_branch
    %19 = sbr.rel (0) target = $region17
  $region16: #{chatbot_forward.1} parent=0 // pred_region
    _
  $region17: #{chatbot_forward.1} parent=0 // pred_fallthru
    _
  // Predicated region
  $region18: #{chatbot_forward.1} parent=0 // pred_check
    _
  $region19: #{chatbot_forward.1} parent=0 // pred_check_branch
    %21 = sbr.rel (0) target = $region21
  $region20: #{chatbot_forward.1} parent=0 // pred_region
    _
  $region21: #{chatbot_forward.1} parent=0 // pred_fallthru
    _
  // Predicated region
  $region22: #{chatbot_forward.1} parent=0 // pred_check
    _
  $region23: #{chatbot_forward.1} parent=0 // pred_check_branch
    %23 = sbr.rel (0) target = $region25
  $region24: #{chatbot_forward.1} parent=0 // pred_region
    _
  $region25: #{chatbot_forward.1} parent=0 // pred_fallthru
    _
  // Predicated region
  $region26: #{chatbot_forward.1} parent=0 // pred_check
    _
  $region27: #{chatbot_forward.1} parent=0 // pred_check_branch
    %25 = sbr.rel (0) target = $region29
  $region28: #{chatbot_forward.1} parent=0 // pred_region
    _
  $region29: #{chatbot_forward.1} parent=0 // pred_fallthru
    _
  %v26 = vld [vmem:[%s0] sm:$0xff]
  %v27 = vld [vmem:[%s0 + $0x8] sm:$0xff]
  %v28 = vld [vmem:[%s1] sm:$0xff]
  %v29 = vld [vmem:[%s1 + $0x8] sm:$0xff]
  %v30 = vld [vmem:[%s1 + $0x10] sm:$0xff]
  %v31 = vld [vmem:[%s1 + $0x18] sm:$0xff]
  %v32 = vld [vmem:[%s1 + $0x20] sm:$0xff]
  %v33 = vld [vmem:[%s1 + $0x28] sm:$0xff]
  %v34 = vld [vmem:[%s1 + $0x30] sm:$0xff]
  %v35 = vld [vmem:[%s1 + $0x38] sm:$0xff]
  %v36 = vld [vmem:[%s2] sm:$0x1]
  %v38 = vlaneseq
  %v39 = vshrl.u32 %v38, 7
  %v40 = vsub.s32 0, %v39
  %v41 = vrot.slane %v36, %v40
  %vm43 = vcmask 523264
  %v45 = vsel %vm43, %v26, 0
  %v48 = vsel %vm43, %v27, 0
  %50 = vmatprep.subr.mxu0 0.0
  %51 = vmatpush1.msra.mxu0 %v28
  %52 = vmatprep.subr.mxu0 0.0
  %53 = vmatpush1.msra.mxu0 %v29
  %54 = vmatprep.subr.mxu0 0.0
  %55 = vmatpush1.msra.mxu0 %v30
  %56 = vmatprep.subr.mxu0 0.0
  %57 = vmatpush1.msra.mxu0 %v31
  %58 = vmatprep.subr.mxu0 0.0
  %59 = vmatpush1.msra.mxu0 %v32
  %60 = vmatprep.subr.mxu0 0.0
  %61 = vmatpush1.msra.mxu0 %v33
  %62 = vmatprep.subr.mxu0 0.0
  %63 = vmatpush1.msra.mxu0 %v34
  %64 = vmatprep.subr.mxu0 0.0
  %65 = vmatpush1.msra.mxu0 %v35
  %66 = vmatprep.subr.mxu0 0.0
  %67 = vmatpush1.msra.mxu0 0.0
  %68 = vmatprep.subr.mxu0 0.0
  %69 = vmatpush1.msra.mxu0 0.0
  %70 = vmatprep.subr.mxu0 0.0
  %71 = vmatpush1.msra.mxu0 0.0
  %72 = vmatprep.subr.mxu0 0.0
  %73 = vmatpush1.msra.mxu0 0.0
  %74 = vmatprep.subr.mxu0 0.0
  %75 = vmatpush1.msra.mxu0 0.0
  %76 = vmatprep.subr.mxu0 0.0
  %77 = vmatpush1.msra.mxu0 0.0
  %78 = vmatprep.subr.mxu0 0.0
  %79 = vmatpush1.msra.mxu0 0.0
  %80 = vmatprep.subr.mxu0 0.0
  %81 = vmatpush1.msra.mxu0 0.0
  %82 = vmatprep.subr.mxu0 0.0
  %83 = vmatpush1.msra.mxu0 0.0
  %84 = vmatprep.subr.mxu0 0.0
  %85 = vmatpush1.msra.mxu0 0.0
  %86 = vmatprep.subr.mxu0 0.0
  %87 = vmatpush1.msra.mxu0 0.0
  %88 = vmatprep.subr.mxu0 0.0
  %89 = vmatpush1.msra.mxu0 0.0
  %90 = vmatprep.subr.mxu0 0.0
  %91 = vmatpush1.msra.mxu0 0.0
  %92 = vmatprep.subr.mxu0 0.0
  %93 = vmatpush1.msra.mxu0 0.0
  %94 = vmatprep.subr.mxu0 0.0
  %95 = vmatpush1.msra.mxu0 0.0
  %96 = vmatprep.subr.mxu0 0.0
  %97 = vmatpush1.msra.mxu0 0.0
  %98 = vmatprep.subr.mxu0 0.0
  %99 = vmatpush1.msra.mxu0 0.0
  %100 = vmatprep.subr.mxu0 0.0
  %101 = vmatpush1.msra.mxu0 0.0
  %102 = vmatprep.subr.mxu0 0.0
  %103 = vmatpush1.msra.mxu0 0.0
  %104 = vmatprep.subr.mxu0 0.0
  %105 = vmatpush1.msra.mxu0 0.0
  %106 = vmatprep.subr.mxu0 0.0
  %107 = vmatpush1.msra.mxu0 0.0
  %108 = vmatprep.subr.mxu0 0.0
  %109 = vmatpush1.msra.mxu0 0.0
  %110 = vmatprep.subr.mxu0 0.0
  %111 = vmatpush1.msra.mxu0 0.0
  %112 = vmatprep.subr.mxu0 0.0
  %113 = vmatpush1.msra.mxu0 0.0
  %114 = vmatprep.mubr.f32.mxu0 0.0
  %115 = vmatmul.mubr.f32.gmra.mrb[0].mxu0 %v45
  %v116 = vpop.f32.mrb[0].mxu0
  %v117 = vadd.f32 %v41, %v116
  %v118 = vpop.f32.mrb[0].mxu0
  %119 = vmatprep.mubr.f32.mxu0 0.0
  %120 = vmatmul.mubr.f32.gmra.mrb[0].mxu0 %v48
  %v121 = vpop.f32.mrb[0].mxu0
  %v122 = vadd.f32 %v41, %v121
  %v123 = vpop.f32.mrb[0].mxu0
  %124 = vdwg.mxu0
  %v125 = vmax.f32 %v117, 0.0
  %v126 = vmax.f32 %v122, 0.0
  %v127 = vld [vmem:[%s3] sm:$0xff]
  %v128 = vld [vmem:[%s3 + $0x8] sm:$0xff]
  %v129 = vld [vmem:[%s3 + $0x10] sm:$0xff]
  %v130 = vld [vmem:[%s3 + $0x18] sm:$0xff]
  %v131 = vld [vmem:[%s3 + $0x20] sm:$0xff]
  %v132 = vld [vmem:[%s3 + $0x28] sm:$0xff]
  %v133 = vld [vmem:[%s3 + $0x30] sm:$0xff]
  %v134 = vld [vmem:[%s3 + $0x38] sm:$0xff]
  %v135 = vld [vmem:[%s3 + $0x40] sm:$0xff]
  %v136 = vld [vmem:[%s3 + $0x48] sm:$0xff]
  %v137 = vld [vmem:[%s3 + $0x50] sm:$0xff]
  %v138 = vld [vmem:[%s3 + $0x58] sm:$0xff]
  %v139 = vld [vmem:[%s3 + $0x60] sm:$0xff]
  %v140 = vld [vmem:[%s3 + $0x68] sm:$0xff]
  %v141 = vld [vmem:[%s3 + $0x70] sm:$0xff]
  %v142 = vld [vmem:[%s3 + $0x78] sm:$0xff]
  %v143 = vld [vmem:[%s4] sm:$0x1]
  %v145 = vlaneseq
  %v146 = vshrl.u32 %v145, 7
  %v147 = vsub.s32 0, %v146
  %v148 = vrot.slane %v143, %v147
  %150 = vmatprep.subr.mxu0 0.0
  %151 = vmatpush1.msra.mxu0 %v127
  %152 = vmatprep.subr.mxu0 0.0
  %153 = vmatpush1.msra.mxu0 %v128
  %154 = vmatprep.subr.mxu0 0.0
  %155 = vmatpush1.msra.mxu0 %v129
  %156 = vmatprep.subr.mxu0 0.0
  %157 = vmatpush1.msra.mxu0 %v130
  %158 = vmatprep.subr.mxu0 0.0
  %159 = vmatpush1.msra.mxu0 %v131
  %160 = vmatprep.subr.mxu0 0.0
  %161 = vmatpush1.msra.mxu0 %v132
  %162 = vmatprep.subr.mxu0 0.0
  %163 = vmatpush1.msra.mxu0 %v133
  %164 = vmatprep.subr.mxu0 0.0
  %165 = vmatpush1.msra.mxu0 %v134
  %166 = vmatprep.subr.mxu0 0.0
  %167 = vmatpush1.msra.mxu0 %v135
  %168 = vmatprep.subr.mxu0 0.0
  %169 = vmatpush1.msra.mxu0 %v136
  %170 = vmatprep.subr.mxu0 0.0
  %171 = vmatpush1.msra.mxu0 %v137
  %172 = vmatprep.subr.mxu0 0.0
  %173 = vmatpush1.msra.mxu0 %v138
  %174 = vmatprep.subr.mxu0 0.0
  %175 = vmatpush1.msra.mxu0 %v139
  %176 = vmatprep.subr.mxu0 0.0
  %177 = vmatpush1.msra.mxu0 %v140
  %178 = vmatprep.subr.mxu0 0.0
  %179 = vmatpush1.msra.mxu0 %v141
  %180 = vmatprep.subr.mxu0 0.0
  %181 = vmatpush1.msra.mxu0 %v142
  %182 = vmatprep.subr.mxu0 0.0
  %183 = vmatpush1.msra.mxu0 0.0
  %184 = vmatprep.subr.mxu0 0.0
  %185 = vmatpush1.msra.mxu0 0.0
  %186 = vmatprep.subr.mxu0 0.0
  %187 = vmatpush1.msra.mxu0 0.0
  %188 = vmatprep.subr.mxu0 0.0
  %189 = vmatpush1.msra.mxu0 0.0
  %190 = vmatprep.subr.mxu0 0.0
  %191 = vmatpush1.msra.mxu0 0.0
  %192 = vmatprep.subr.mxu0 0.0
  %193 = vmatpush1.msra.mxu0 0.0
  %194 = vmatprep.subr.mxu0 0.0
  %195 = vmatpush1.msra.mxu0 0.0
  %196 = vmatprep.subr.mxu0 0.0
  %197 = vmatpush1.msra.mxu0 0.0
  %198 = vmatprep.subr.mxu0 0.0
  %199 = vmatpush1.msra.mxu0 0.0
  %200 = vmatprep.subr.mxu0 0.0
  %201 = vmatpush1.msra.mxu0 0.0
  %202 = vmatprep.subr.mxu0 0.0
  %203 = vmatpush1.msra.mxu0 0.0
  %204 = vmatprep.subr.mxu0 0.0
  %205 = vmatpush1.msra.mxu0 0.0
  %206 = vmatprep.subr.mxu0 0.0
  %207 = vmatpush1.msra.mxu0 0.0
  %208 = vmatprep.subr.mxu0 0.0
  %209 = vmatpush1.msra.mxu0 0.0
  %210 = vmatprep.subr.mxu0 0.0
  %211 = vmatpush1.msra.mxu0 0.0
  %212 = vmatprep.subr.mxu0 0.0
  %213 = vmatpush1.msra.mxu0 0.0
  %214 = vmatprep.mubr.f32.mxu0 0.0
  %215 = vmatmul.mubr.f32.gmra.mrb[0].mxu0 %v125
  %v216 = vpop.f32.mrb[0].mxu0
  %v217 = vadd.f32 %v148, %v216
  %v218 = vpop.f32.mrb[0].mxu0
  %219 = vmatprep.mubr.f32.mxu0 0.0
  %220 = vmatmul.mubr.f32.gmra.mrb[0].mxu0 %v126
  %v221 = vpop.f32.mrb[0].mxu0
  %v222 = vadd.f32 %v148, %v221
  %v223 = vpop.f32.mrb[0].mxu0
  %224 = vdwg.mxu0
  %v225 = vmax.f32 %v217, 0.0
  %v226 = vmax.f32 %v222, 0.0
  %v227 = vld [vmem:[%s5] sm:$0xff]
  %v228 = vld [vmem:[%s5 + $0x8] sm:$0xff]
  %v229 = vld [vmem:[%s5 + $0x10] sm:$0xff]
  %v230 = vld [vmem:[%s5 + $0x18] sm:$0xff]
  %v231 = vld [vmem:[%s5 + $0x20] sm:$0xff]
  %v232 = vld [vmem:[%s5 + $0x28] sm:$0xff]
  %v233 = vld [vmem:[%s5 + $0x30] sm:$0xff]
  %v234 = vld [vmem:[%s5 + $0x38] sm:$0xff]
  %v235 = vld [vmem:[%s5 + $0x40] sm:$0xff]
  %v236 = vld [vmem:[%s5 + $0x48] sm:$0xff]
  %v237 = vld [vmem:[%s5 + $0x50] sm:$0xff]
  %v238 = vld [vmem:[%s5 + $0x58] sm:$0xff]
  %v239 = vld [vmem:[%s5 + $0x60] sm:$0xff]
  %v240 = vld [vmem:[%s5 + $0x68] sm:$0xff]
  %v241 = vld [vmem:[%s5 + $0x70] sm:$0xff]
  %v242 = vld [vmem:[%s5 + $0x78] sm:$0xff]
  %v243 = vld [vmem:[%s6] sm:$0x1]
  %v245 = vlaneseq
  %v246 = vshrl.u32 %v245, 7
  %v247 = vsub.s32 0, %v246
  %v248 = vrot.slane %v243, %v247
  %250 = vmatprep.subr.mxu0 0.0
  %251 = vmatpush1.msra.mxu0 %v227
  %252 = vmatprep.subr.mxu0 0.0
  %253 = vmatpush1.msra.mxu0 %v228
  %254 = vmatprep.subr.mxu0 0.0
  %255 = vmatpush1.msra.mxu0 %v229
  %256 = vmatprep.subr.mxu0 0.0
  %257 = vmatpush1.msra.mxu0 %v230
  %258 = vmatprep.subr.mxu0 0.0
  %259 = vmatpush1.msra.mxu0 %v231
  %260 = vmatprep.subr.mxu0 0.0
  %261 = vmatpush1.msra.mxu0 %v232
  %262 = vmatprep.subr.mxu0 0.0
  %263 = vmatpush1.msra.mxu0 %v233
  %264 = vmatprep.subr.mxu0 0.0
  %265 = vmatpush1.msra.mxu0 %v234
  %266 = vmatprep.subr.mxu0 0.0
  %267 = vmatpush1.msra.mxu0 %v235
  %268 = vmatprep.subr.mxu0 0.0
  %269 = vmatpush1.msra.mxu0 %v236
  %270 = vmatprep.subr.mxu0 0.0
  %271 = vmatpush1.msra.mxu0 %v237
  %272 = vmatprep.subr.mxu0 0.0
  %273 = vmatpush1.msra.mxu0 %v238
  %274 = vmatprep.subr.mxu0 0.0
  %275 = vmatpush1.msra.mxu0 %v239
  %276 = vmatprep.subr.mxu0 0.0
  %277 = vmatpush1.msra.mxu0 %v240
  %278 = vmatprep.subr.mxu0 0.0
  %279 = vmatpush1.msra.mxu0 %v241
  %280 = vmatprep.subr.mxu0 0.0
  %281 = vmatpush1.msra.mxu0 %v242
  %282 = vmatprep.subr.mxu0 0.0
  %283 = vmatpush1.msra.mxu0 0.0
  %284 = vmatprep.subr.mxu0 0.0
  %285 = vmatpush1.msra.mxu0 0.0
  %286 = vmatprep.subr.mxu0 0.0
  %287 = vmatpush1.msra.mxu0 0.0
  %288 = vmatprep.subr.mxu0 0.0
  %289 = vmatpush1.msra.mxu0 0.0
  %290 = vmatprep.subr.mxu0 0.0
  %291 = vmatpush1.msra.mxu0 0.0
  %292 = vmatprep.subr.mxu0 0.0
  %293 = vmatpush1.msra.mxu0 0.0
  %294 = vmatprep.subr.mxu0 0.0
  %295 = vmatpush1.msra.mxu0 0.0
  %296 = vmatprep.subr.mxu0 0.0
  %297 = vmatpush1.msra.mxu0 0.0
  %298 = vmatprep.subr.mxu0 0.0
  %299 = vmatpush1.msra.mxu0 0.0
  %300 = vmatprep.subr.mxu0 0.0
  %301 = vmatpush1.msra.mxu0 0.0
  %302 = vmatprep.subr.mxu0 0.0
  %303 = vmatpush1.msra.mxu0 0.0
  %304 = vmatprep.subr.mxu0 0.0
  %305 = vmatpush1.msra.mxu0 0.0
  %306 = vmatprep.subr.mxu0 0.0
  %307 = vmatpush1.msra.mxu0 0.0
  %308 = vmatprep.subr.mxu0 0.0
  %309 = vmatpush1.msra.mxu0 0.0
  %310 = vmatprep.subr.mxu0 0.0
  %311 = vmatpush1.msra.mxu0 0.0
  %312 = vmatprep.subr.mxu0 0.0
  %313 = vmatpush1.msra.mxu0 0.0
  %314 = vmatprep.mubr.f32.mxu0 0.0
  %315 = vmatmul.mubr.f32.gmra.mrb[0].mxu0 %v225
  %v316 = vpop.f32.mrb[0].mxu0
  %v317 = vadd.f32 %v248, %v316
  %v318 = vpop.f32.mrb[0].mxu0
  %319 = vmatprep.mubr.f32.mxu0 0.0
  %320 = vmatmul.mubr.f32.gmra.mrb[0].mxu0 %v226
  %v321 = vpop.f32.mrb[0].mxu0
  %v322 = vadd.f32 %v248, %v321
  %v323 = vpop.f32.mrb[0].mxu0
  %324 = vdwg.mxu0
  %325 = vst [vmem:[%s7] sm:$0xff] %v317
  %326 = vst [vmem:[%s7 + $0x8] sm:$0xff] %v322
  // Predicated region
  $region30: #{chatbot_forward.1} parent=0 // pred_check
    _
  $region31: #{chatbot_forward.1} parent=0 // pred_check_branch
    %328 = sbr.rel (0) target = $region33
  $region32: #{chatbot_forward.1} parent=0 // pred_region
    _
  $region33: #{chatbot_forward.1} parent=0 // pred_fallthru
    _
  // Predicated region
  $region34: #{chatbot_forward.1} parent=0 // pred_check
    _
  $region35: #{chatbot_forward.1} parent=0 // pred_check_branch
    %330 = sbr.rel (0) target = $region37
  $region36: #{chatbot_forward.1} parent=0 // pred_region
    _
  $region37: #{chatbot_forward.1} parent=0 // pred_fallthru
    _

</llo_original>
